<compile_context>
chip_gen: v5e
topology: v5e:2x2
jax: 0.10.0
libtpu: 0.0.40
codegen_flags: <defaults>
</compile_context>

<pallas_src>
import functools
from math import sqrt

import jax
import jax.numpy as jnp
from jax.experimental import pallas as pl
from jax.experimental.pallas import tpu as pltpu


def _round_up(x, m):
    return (x + m - 1) // m * m


def _prenet_kernel(x_ref, w1_ref, b1_ref, w2_ref, b2_ref, w3_ref, b3_ref, o_ref):
    # block 0: Linear(mel -> hidden) + ReLU   (Dropout == identity in eval)
    x = x_ref[...].astype(jnp.bfloat16)
    h = jnp.dot(x, w1_ref[...], preferred_element_type=jnp.float32)
    h = jnp.maximum(h + b1_ref[...], 0.0)
    # block 1: Linear(hidden -> hidden) + ReLU
    h = jnp.dot(h.astype(jnp.bfloat16), w2_ref[...],
                preferred_element_type=jnp.float32)
    h = jnp.maximum(h + b2_ref[...], 0.0)
    # norm: Linear(hidden -> hidden)
    y = jnp.dot(h.astype(jnp.bfloat16), w3_ref[...],
                preferred_element_type=jnp.float32) + b3_ref[...]
    o_ref[...] = y.astype(o_ref.dtype)
    # TODO(synk): training-mode dropout (stateful PRNG masks via pltpu.prng_seed /
    # pltpu.prng_random_bits) intentionally omitted; PyTorch eval() Dropout is identity.


@functools.partial(jax.jit, static_argnames=("tm", "out_dtype"))
def decoder_prenet(x, w1, b1, w2, b2, w3, b3, *, tm=2048, out_dtype=None):
    B, T, mel = x.shape
    hidden = w1.shape[1]
    M = B * T
    out_dtype = x.dtype if out_dtype is None else jnp.dtype(out_dtype)
    x2d = x.reshape(M, mel)  # contiguous reshape: free, no HBM pass

    # Row tile: multiple of 8, capped at `tm`, and capped at ceil(M/2) so the
    # grid always has >= 2 steps (v7x megacore: both TCs get work). No row
    # padding — Pallas masks the ragged tail block on store.
    TM = max(8, min(tm, _round_up(pl.cdiv(M, 2), 8)))
    grid = pl.cdiv(M, TM)

    # bf16 matmul operands (tiny; resident in VMEM across the whole grid via
    # constant index maps). Input x is cast to bf16 inside the kernel — no
    # extra wrapper pass over the big activation stream.
    w1b = w1.astype(jnp.bfloat16)
    w2b = w2.astype(jnp.bfloat16)
    w3b = w3.astype(jnp.bfloat16)

    const = lambda shape: pl.BlockSpec(shape, lambda i: (0, 0))

    flops = 2 * M * (mel * hidden + 2 * hidden * hidden)
    bytes_accessed = (
        x2d.size * x2d.dtype.itemsize              # streamed input
        + M * hidden * out_dtype.itemsize          # streamed output
        + 2 * (w1b.size + w2b.size + w3b.size)     # bf16 weights (read once)
        + 4 * (b1.size + b2.size + b3.size)        # f32 biases
    )

    out2d = pl.pallas_call(
        _prenet_kernel,
        out_shape=jax.ShapeDtypeStruct((M, hidden), out_dtype),
        grid_spec=pltpu.PrefetchScalarGridSpec(
            num_scalar_prefetch=0,
            grid=(grid,),
            in_specs=[
                pl.BlockSpec((TM, mel), lambda i: (i, 0)),   # x tile (last dim == full dim)
                const((mel, hidden)), const((1, hidden)),    # w1, b1 (resident)
                const((hidden, hidden)), const((1, hidden)), # w2, b2 (resident)
                const((hidden, hidden)), const((1, hidden)), # w3, b3 (resident)
            ],
            out_specs=pl.BlockSpec((TM, hidden), lambda i: (i, 0)),
        ),
        compiler_params=pltpu.CompilerParams(
            dimension_semantics=("parallel",),
            vmem_limit_bytes=32 * 1024 * 1024),
        cost_estimate=pl.CostEstimate(
            flops=flops, transcendentals=0, bytes_accessed=bytes_accessed),
    )(x2d, w1b, b1, w2b, b2, w3b, b3)

    return out2d.reshape(B, T, hidden)


def _xavier_uniform(key, in_dim, out_dim, gain):
    # Matches nn.init.xavier_uniform_ on a weight of shape (out_dim, in_dim);
    # we store the transpose (in_dim, out_dim) for row-major x @ W.
    bound = gain * sqrt(6.0 / (in_dim + out_dim))
    return jax.random.uniform(key, (in_dim, out_dim), jnp.float32, -bound, bound)


if __name__ == "__main__":
    mel_size, hidden_size = 80, 256
    B, T = 2, 8

    key = jax.random.PRNGKey(0)
    kx, k1, k2, k3, kb1, kb2, kb3 = jax.random.split(key, 7)

    x = jax.random.normal(kx, (B, T, mel_size), jnp.float32)

    gain_relu = sqrt(2.0)  # nn.init.calculate_gain('relu')
    gain_lin = 1.0         # nn.init.calculate_gain('linear')

    w1 = _xavier_uniform(k1, mel_size, hidden_size, gain_relu)
    w2 = _xavier_uniform(k2, hidden_size, hidden_size, gain_relu)
    w3 = _xavier_uniform(k3, hidden_size, hidden_size, gain_lin)

    # nn.Linear default bias init: U(-1/sqrt(fan_in), 1/sqrt(fan_in)); kept (1, H) for TPU 2D layout.
    b1 = jax.random.uniform(kb1, (1, hidden_size), jnp.float32,
                            -1.0 / sqrt(mel_size), 1.0 / sqrt(mel_size))
    b2 = jax.random.uniform(kb2, (1, hidden_size), jnp.float32,
                            -1.0 / sqrt(hidden_size), 1.0 / sqrt(hidden_size))
    b3 = jax.random.uniform(kb3, (1, hidden_size), jnp.float32,
                            -1.0 / sqrt(hidden_size), 1.0 / sqrt(hidden_size))

    out = decoder_prenet(x, w1, b1, w2, b2, w3, b3)
    jax.block_until_ready(out)
    assert out.shape == (B, T, hidden_size)
    assert out.dtype == x.dtype

    # Reference 1: mimic the kernel's bf16 matmul operands / f32 accumulation (tight check).
    xb = x.reshape(-1, mel_size)
    h = jnp.maximum(jnp.dot(xb.astype(jnp.bfloat16), w1.astype(jnp.bfloat16),
                            preferred_element_type=jnp.float32) + b1, 0.0)
    h = jnp.maximum(jnp.dot(h.astype(jnp.bfloat16), w2.astype(jnp.bfloat16),
                            preferred_element_type=jnp.float32) + b2, 0.0)
    ref_bf16 = (jnp.dot(h.astype(jnp.bfloat16), w3.astype(jnp.bfloat16),
                        preferred_element_type=jnp.float32) + b3
                ).reshape(B, T, hidden_size)
    assert jnp.allclose(out, ref_bf16, atol=1e-4, rtol=1e-4)

    # Reference 2: full-f32 PyTorch-equivalent path (loose check: bf16 operand rounding).
    hf = jnp.maximum(xb @ w1 + b1, 0.0)
    hf = jnp.maximum(hf @ w2 + b2, 0.0)
    ref_f32 = (hf @ w3 + b3).reshape(B, T, hidden_size)
    assert jnp.allclose(out, ref_f32, atol=5e-2, rtol=5e-2)

    # Optional bf16 output path (for bf16 consumers) — sanity check it runs.
    out_bf16 = decoder_prenet(x, w1, b1, w2, b2, w3, b3, out_dtype=jnp.bfloat16)
    jax.block_until_ready(out_bf16)
    assert out_bf16.dtype == jnp.bfloat16
    assert jnp.allclose(out_bf16.astype(jnp.float32), ref_f32, atol=1e-1, rtol=1e-1)

    print("KERNEL_OK")
</pallas_src>

<mosaic_0001>
module attributes {stable_mosaic.version = 11 : i64} {
  func.func @_prenet_kernel(%arg0: i32, %arg1: memref<8x80xf32, #tpu.memory_space<vmem>>, %arg2: memref<80x256xbf16, #tpu.memory_space<vmem>>, %arg3: memref<1x256xf32, #tpu.memory_space<vmem>>, %arg4: memref<256x256xbf16, #tpu.memory_space<vmem>>, %arg5: memref<1x256xf32, #tpu.memory_space<vmem>>, %arg6: memref<256x256xbf16, #tpu.memory_space<vmem>>, %arg7: memref<1x256xf32, #tpu.memory_space<vmem>>, %arg8: memref<8x256xf32, #tpu.memory_space<vmem>>) attributes {dimension_semantics = [#tpu.dimension_semantics<parallel>], iteration_bounds = array<i64: 2>, scalar_prefetch = 0 : i64, scratch_operands = 0 : i64, tpu.core_type = #tpu.core_type<tc>, window_params = [{transform_indices = @transform_0, window_bounds = array<i64: 8, 80>}, {pipeline_mode = #tpu.pipeline_mode<synchronous>, transform_indices = @transform_1, window_bounds = array<i64: 80, 256>}, {pipeline_mode = #tpu.pipeline_mode<synchronous>, transform_indices = @transform_2, window_bounds = array<i64: 1, 256>}, {pipeline_mode = #tpu.pipeline_mode<synchronous>, transform_indices = @transform_3, window_bounds = array<i64: 256, 256>}, {pipeline_mode = #tpu.pipeline_mode<synchronous>, transform_indices = @transform_4, window_bounds = array<i64: 1, 256>}, {pipeline_mode = #tpu.pipeline_mode<synchronous>, transform_indices = @transform_5, window_bounds = array<i64: 256, 256>}, {pipeline_mode = #tpu.pipeline_mode<synchronous>, transform_indices = @transform_6, window_bounds = array<i64: 1, 256>}, {transform_indices = @transform_7, window_bounds = array<i64: 8, 256>}]} {
    %c0 = arith.constant 0 : index
    %c0_0 = arith.constant 0 : index
    %0 = vector.load %arg1[%c0, %c0_0] : memref<8x80xf32, #tpu.memory_space<vmem>>, vector<8x80xf32>
    %1 = arith.truncf %0 : vector<8x80xf32> to vector<8x80xbf16>
    %c0_1 = arith.constant 0 : index
    %c0_2 = arith.constant 0 : index
    %2 = vector.load %arg2[%c0_1, %c0_2] : memref<80x256xbf16, #tpu.memory_space<vmem>>, vector<80x256xbf16>
    %cst = arith.constant dense<0.000000e+00> : vector<8x256xf32>
    %3 = tpu.matmul %1, %2, %cst {dimension_numbers = #tpu.dot_dimension_numbers<[1], [0], [0], [1], [0, 0, 1, 1], [], []>} : vector<8x80xbf16>, vector<80x256xbf16>, vector<8x256xf32> -> vector<8x256xf32>
    %c0_3 = arith.constant 0 : index
    %c0_4 = arith.constant 0 : index
    %4 = vector.load %arg3[%c0_3, %c0_4] : memref<1x256xf32, #tpu.memory_space<vmem>>, vector<1x256xf32>
    %5 = vector.broadcast %4 : vector<1x256xf32> to vector<8x256xf32>
    %6 = arith.addf %3, %5 : vector<8x256xf32>
    %cst_5 = arith.constant 0.000000e+00 : f32
    %7 = vector.broadcast %cst_5 : f32 to vector<8x256xf32>
    %8 = arith.maximumf %6, %7 : vector<8x256xf32>
    %9 = arith.truncf %8 : vector<8x256xf32> to vector<8x256xbf16>
    %c0_6 = arith.constant 0 : index
    %c0_7 = arith.constant 0 : index
    %10 = vector.load %arg4[%c0_6, %c0_7] : memref<256x256xbf16, #tpu.memory_space<vmem>>, vector<256x256xbf16>
    %cst_8 = arith.constant dense<0.000000e+00> : vector<8x256xf32>
    %11 = tpu.matmul %9, %10, %cst_8 {dimension_numbers = #tpu.dot_dimension_numbers<[1], [0], [0], [1], [0, 0, 1, 1], [], []>} : vector<8x256xbf16>, vector<256x256xbf16>, vector<8x256xf32> -> vector<8x256xf32>
    %c0_9 = arith.constant 0 : index
    %c0_10 = arith.constant 0 : index
    %12 = vector.load %arg5[%c0_9, %c0_10] : memref<1x256xf32, #tpu.memory_space<vmem>>, vector<1x256xf32>
    %13 = vector.broadcast %12 : vector<1x256xf32> to vector<8x256xf32>
    %14 = arith.addf %11, %13 : vector<8x256xf32>
    %cst_11 = arith.constant 0.000000e+00 : f32
    %15 = vector.broadcast %cst_11 : f32 to vector<8x256xf32>
    %16 = arith.maximumf %14, %15 : vector<8x256xf32>
    %17 = arith.truncf %16 : vector<8x256xf32> to vector<8x256xbf16>
    %c0_12 = arith.constant 0 : index
    %c0_13 = arith.constant 0 : index
    %18 = vector.load %arg6[%c0_12, %c0_13] : memref<256x256xbf16, #tpu.memory_space<vmem>>, vector<256x256xbf16>
    %cst_14 = arith.constant dense<0.000000e+00> : vector<8x256xf32>
    %19 = tpu.matmul %17, %18, %cst_14 {dimension_numbers = #tpu.dot_dimension_numbers<[1], [0], [0], [1], [0, 0, 1, 1], [], []>} : vector<8x256xbf16>, vector<256x256xbf16>, vector<8x256xf32> -> vector<8x256xf32>
    %c0_15 = arith.constant 0 : index
    %c0_16 = arith.constant 0 : index
    %20 = vector.load %arg7[%c0_15, %c0_16] : memref<1x256xf32, #tpu.memory_space<vmem>>, vector<1x256xf32>
    %21 = vector.broadcast %20 : vector<1x256xf32> to vector<8x256xf32>
    %22 = arith.addf %19, %21 : vector<8x256xf32>
    %c0_17 = arith.constant 0 : index
    %c0_18 = arith.constant 0 : index
    %23 = vector.load %arg8[%c0_17, %c0_18] : memref<8x256xf32, #tpu.memory_space<vmem>>, vector<8x256xf32>
    tpu.vector_store %arg8[%c0_17, %c0_18], %22 {strides = array<i32>} : memref<8x256xf32, #tpu.memory_space<vmem>>, vector<8x256xf32>,
    return
  }
  func.func @transform_0(%arg0: i32) -> (i32, i32) {
    %c0_i32 = arith.constant 0 : i32
    %c0_i32_0 = arith.constant 0 : i32
    return %arg0, %c0_i32 : i32, i32
  }
  func.func @transform_1(%arg0: i32) -> (i32, i32) {
    %c0_i32 = arith.constant 0 : i32
    %c0_i32_0 = arith.constant 0 : i32
    %c0_i32_1 = arith.constant 0 : i32
    return %c0_i32, %c0_i32_0 : i32, i32
  }
  func.func @transform_2(%arg0: i32) -> (i32, i32) {
    %c0_i32 = arith.constant 0 : i32
    %c0_i32_0 = arith.constant 0 : i32
    %c0_i32_1 = arith.constant 0 : i32
    return %c0_i32, %c0_i32_0 : i32, i32
  }
  func.func @transform_3(%arg0: i32) -> (i32, i32) {
    %c0_i32 = arith.constant 0 : i32
    %c0_i32_0 = arith.constant 0 : i32
    %c0_i32_1 = arith.constant 0 : i32
    return %c0_i32, %c0_i32_0 : i32, i32
  }
  func.func @transform_4(%arg0: i32) -> (i32, i32) {
    %c0_i32 = arith.constant 0 : i32
    %c0_i32_0 = arith.constant 0 : i32
    %c0_i32_1 = arith.constant 0 : i32
    return %c0_i32, %c0_i32_0 : i32, i32
  }
  func.func @transform_5(%arg0: i32) -> (i32, i32) {
    %c0_i32 = arith.constant 0 : i32
    %c0_i32_0 = arith.constant 0 : i32
    %c0_i32_1 = arith.constant 0 : i32
    return %c0_i32, %c0_i32_0 : i32, i32
  }
  func.func @transform_6(%arg0: i32) -> (i32, i32) {
    %c0_i32 = arith.constant 0 : i32
    %c0_i32_0 = arith.constant 0 : i32
    %c0_i32_1 = arith.constant 0 : i32
    return %c0_i32, %c0_i32_0 : i32, i32
  }
  func.func @transform_7(%arg0: i32) -> (i32, i32) {
    %c0_i32 = arith.constant 0 : i32
    %c0_i32_0 = arith.constant 0 : i32
    return %arg0, %c0_i32 : i32, i32
  }
}

</mosaic_0001>

<llo_original>
// kernel: decoder_prenet.1
$region0: #{decoder_prenet.1}
  #allocation0 [shape = 'u32[]', space=smem, size = 0x4, offset = 0x4, fixed_abs, tag = 'smem constant byte address 0x4 - core index']
  #allocation1 [shape = 'u32[72,128]{1,0:T(1,128)}', space=vmem, size = 0x9000, scoped, tag = 'internal scratch']
  %s0 = inlined_call_operand.vmem [shape: f32[16,80], index: 0, kind: input, shape index: {}]
  %s1 = inlined_call_operand.vmem [shape: bf16[80,256], index: 1, kind: input, shape index: {}]
  %s2 = inlined_call_operand.vmem [shape: f32[1,256], index: 2, kind: input, shape index: {}]
  %s3 = inlined_call_operand.vmem [shape: bf16[256,256], index: 3, kind: input, shape index: {}]
  %s4 = inlined_call_operand.vmem [shape: f32[1,256], index: 4, kind: input, shape index: {}]
  %s5 = inlined_call_operand.vmem [shape: bf16[256,256], index: 5, kind: input, shape index: {}]
  %s6 = inlined_call_operand.vmem [shape: f32[1,256], index: 6, kind: input, shape index: {}]
  %s7 = inlined_call_operand.hbm [shape: f32[16,256], index: 7, kind: output, shape index: {}]
  %s8 = sld [smem:[#allocation0]]
  $region61: #{decoder_prenet.1} parent=0
    _
  %s10 = ssub.s32 1, %s8
  %s11 = scalar_select 0, %s10, %s8
  $region1: #{decoder_prenet.1} parent=0
    #allocation2 [shape = 'u8[16384]{0}', space=vmem, size = 0x4000, scoped, tag = 'output window, operand 0']
    #allocation3 [shape = 's32[2]{0}', space=sflag, size = 0x8, scoped, tag = 'scoped memory for decoder_prenet.1']
    %12 = vsyncpa [#allocation3], 0
    %s13 = scalar_lea.sflag [#allocation3], 1
    %14 = vsyncpa %s13, 0
    loop: start=0, step=1, limit=4
    $region2: #{decoder_prenet.1} parent=1 // loop_pre_header
      _
    $region3: #{decoder_prenet.1} parent=1 // loop_header
      %s16 = sphi 0, %s20
      %p17 = scmp.ge.s32.totalorder %s16, 4
      %s26 = sphi 0, %s28
      %s29 = sphi 0, %s26
      %s30 = sphi 0, %s29
      %s46 = sphi 0, %s30
      %s50 = sphi 0, %s50
      %s52 = sphi 0, %s50
      %s53 = sphi 0, %s52
      %s67 = sphi 0, %s53
      %s71 = sphi 0, %s71
      %s73 = sphi 0, %s71
      %s74 = sphi 0, %s73
      %s88 = sphi 0, %s74
      %s92 = sphi 0, %s92
      %s94 = sphi 0, %s92
      %s95 = sphi 0, %s94
      %s109 = sphi 0, %s95
      %s113 = sphi 0, %s113
      %s115 = sphi 0, %s113
      %s116 = sphi 0, %s115
      %s130 = sphi 0, %s116
      %s134 = sphi 0, %s134
      %s136 = sphi 0, %s134
      %s137 = sphi 0, %s136
      %s151 = sphi 0, %s137
      %s155 = sphi 0, %s155
      %s157 = sphi 0, %s155
      %s158 = sphi 0, %s157
      %s172 = sphi 0, %s158
      %s178 = sphi 0, %s180
      %s181 = sphi 0, %s178
      %s182 = sphi 0, %s181
      %s198 = sphi 0, %s182
    $region4: #{decoder_prenet.1} parent=1 // loop_header_branch
      %19 = sbr.rel (%p17) target = $region8
    $region5: #{decoder_prenet.1} parent=1 // loop_body
      %s21 = ssub.s32 %s16, 1
      %s22 = ssub.s32 %s16, 2
      %s23 = sadd.s32 %s16, 1
      %s24 = ssub.s32 %s16, %s23
      %p25 = scmp.eq.s32.totalorder %s24, 0
      %s27 = sadd.s32 %s26, 1
      %s28 = scalar_select %p25, %s26, %s27
      %p31 = pneg %p25
      %p32 = scmp.eq.s32.totalorder %s16, 1
      %p33 = por %p31, %p32
      %p34 = scmp.ne.s32.totalorder %s26, %s29
      %p35 = scmp.eq.s32.totalorder %s16, 0
      %p36 = por %p34, %p35
      %p37 = scmp.ne.s32.totalorder %s26, %s29
      %p38 = scmp.eq.s32.totalorder %s21, 1
      %p39 = por %p37, %p38
      %p40 = scmp.ne.s32.totalorder %s29, %s30
      %p41 = scmp.eq.s32.totalorder %s21, 0
      %p42 = por %p40, %p41
      %p43 = scmp.ne.s32.totalorder %s29, %s30
      %p44 = scmp.eq.s32.totalorder %s22, 1
      %p45 = por %p43, %p44
      %p47 = scmp.ne.s32.totalorder %s30, %s46
      %p48 = scmp.eq.s32.totalorder %s22, 0
      %p49 = por %p47, %p48
      %s51 = sadd.s32 %s50, 1
      %p54 = scmp.eq.s32.totalorder %s16, 1
      %p55 = scmp.ne.s32.totalorder %s50, %s52
      %p56 = scmp.eq.s32.totalorder %s16, 0
      %p57 = por %p55, %p56
      %p58 = scmp.ne.s32.totalorder %s50, %s52
      %p59 = scmp.eq.s32.totalorder %s21, 1
      %p60 = por %p58, %p59
      %p61 = scmp.ne.s32.totalorder %s52, %s53
      %p62 = scmp.eq.s32.totalorder %s21, 0
      %p63 = por %p61, %p62
      %p64 = scmp.ne.s32.totalorder %s52, %s53
      %p65 = scmp.eq.s32.totalorder %s22, 1
      %p66 = por %p64, %p65
      %p68 = scmp.ne.s32.totalorder %s53, %s67
      %p69 = scmp.eq.s32.totalorder %s22, 0
      %p70 = por %p68, %p69
      %s72 = sadd.s32 %s71, 1
      %p75 = scmp.eq.s32.totalorder %s16, 1
      %p76 = scmp.ne.s32.totalorder %s71, %s73
      %p77 = scmp.eq.s32.totalorder %s16, 0
      %p78 = por %p76, %p77
      %p79 = scmp.ne.s32.totalorder %s71, %s73
      %p80 = scmp.eq.s32.totalorder %s21, 1
      %p81 = por %p79, %p80
      %p82 = scmp.ne.s32.totalorder %s73, %s74
      %p83 = scmp.eq.s32.totalorder %s21, 0
      %p84 = por %p82, %p83
      %p85 = scmp.ne.s32.totalorder %s73, %s74
      %p86 = scmp.eq.s32.totalorder %s22, 1
      %p87 = por %p85, %p86
      %p89 = scmp.ne.s32.totalorder %s74, %s88
      %p90 = scmp.eq.s32.totalorder %s22, 0
      %p91 = por %p89, %p90
      %s93 = sadd.s32 %s92, 1
      %p96 = scmp.eq.s32.totalorder %s16, 1
      %p97 = scmp.ne.s32.totalorder %s92, %s94
      %p98 = scmp.eq.s32.totalorder %s16, 0
      %p99 = por %p97, %p98
      %p100 = scmp.ne.s32.totalorder %s92, %s94
      %p101 = scmp.eq.s32.totalorder %s21, 1
      %p102 = por %p100, %p101
      %p103 = scmp.ne.s32.totalorder %s94, %s95
      %p104 = scmp.eq.s32.totalorder %s21, 0
      %p105 = por %p103, %p104
      %p106 = scmp.ne.s32.totalorder %s94, %s95
      %p107 = scmp.eq.s32.totalorder %s22, 1
      %p108 = por %p106, %p107
      %p110 = scmp.ne.s32.totalorder %s95, %s109
      %p111 = scmp.eq.s32.totalorder %s22, 0
      %p112 = por %p110, %p111
      %s114 = sadd.s32 %s113, 1
      %p117 = scmp.eq.s32.totalorder %s16, 1
      %p118 = scmp.ne.s32.totalorder %s113, %s115
      %p119 = scmp.eq.s32.totalorder %s16, 0
      %p120 = por %p118, %p119
      %p121 = scmp.ne.s32.totalorder %s113, %s115
      %p122 = scmp.eq.s32.totalorder %s21, 1
      %p123 = por %p121, %p122
      %p124 = scmp.ne.s32.totalorder %s115, %s116
      %p125 = scmp.eq.s32.totalorder %s21, 0
      %p126 = por %p124, %p125
      %p127 = scmp.ne.s32.totalorder %s115, %s116
      %p128 = scmp.eq.s32.totalorder %s22, 1
      %p129 = por %p127, %p128
      %p131 = scmp.ne.s32.totalorder %s116, %s130
      %p132 = scmp.eq.s32.totalorder %s22, 0
      %p133 = por %p131, %p132
      %s135 = sadd.s32 %s134, 1
      %p138 = scmp.eq.s32.totalorder %s16, 1
      %p139 = scmp.ne.s32.totalorder %s134, %s136
      %p140 = scmp.eq.s32.totalorder %s16, 0
      %p141 = por %p139, %p140
      %p142 = scmp.ne.s32.totalorder %s134, %s136
      %p143 = scmp.eq.s32.totalorder %s21, 1
      %p144 = por %p142, %p143
      %p145 = scmp.ne.s32.totalorder %s136, %s137
      %p146 = scmp.eq.s32.totalorder %s21, 0
      %p147 = por %p145, %p146
      %p148 = scmp.ne.s32.totalorder %s136, %s137
      %p149 = scmp.eq.s32.totalorder %s22, 1
      %p150 = por %p148, %p149
      %p152 = scmp.ne.s32.totalorder %s137, %s151
      %p153 = scmp.eq.s32.totalorder %s22, 0
      %p154 = por %p152, %p153
      %s156 = sadd.s32 %s155, 1
      %p159 = scmp.eq.s32.totalorder %s16, 1
      %p160 = scmp.ne.s32.totalorder %s155, %s157
      %p161 = scmp.eq.s32.totalorder %s16, 0
      %p162 = por %p160, %p161
      %p163 = scmp.ne.s32.totalorder %s155, %s157
      %p164 = scmp.eq.s32.totalorder %s21, 1
      %p165 = por %p163, %p164
      %p166 = scmp.ne.s32.totalorder %s157, %s158
      %p167 = scmp.eq.s32.totalorder %s21, 0
      %p168 = por %p166, %p167
      %p169 = scmp.ne.s32.totalorder %s157, %s158
      %p170 = scmp.eq.s32.totalorder %s22, 1
      %p171 = por %p169, %p170
      %p173 = scmp.ne.s32.totalorder %s158, %s172
      %p174 = scmp.eq.s32.totalorder %s22, 0
      %p175 = por %p173, %p174
      %s176 = ssub.s32 %s16, %s23
      %p177 = scmp.eq.s32.totalorder %s176, 0
      %s179 = sadd.s32 %s178, 1
      %s180 = scalar_select %p177, %s178, %s179
      %p183 = pneg %p177
      %p184 = scmp.eq.s32.totalorder %s16, 1
      %p185 = por %p183, %p184
      %p186 = scmp.ne.s32.totalorder %s178, %s181
      %p187 = scmp.eq.s32.totalorder %s16, 0
      %p188 = por %p186, %p187
      %p189 = scmp.ne.s32.totalorder %s178, %s181
      %p190 = scmp.eq.s32.totalorder %s21, 1
      %p191 = por %p189, %p190
      %p192 = scmp.ne.s32.totalorder %s181, %s182
      %p193 = scmp.eq.s32.totalorder %s21, 0
      %p194 = por %p192, %p193
      %p195 = scmp.ne.s32.totalorder %s181, %s182
      %p196 = scmp.eq.s32.totalorder %s22, 1
      %p197 = por %p195, %p196
      %p199 = scmp.ne.s32.totalorder %s182, %s198
      %p200 = scmp.eq.s32.totalorder %s22, 0
      %p201 = por %p199, %p200
      %p202 = scmp.le.s32.totalorder 1, %s16
      %p203 = scmp.lt.s32.totalorder %s16, 3
      %p204 = pnand %p202, %p203
      %p205 = pneg %p204
      // Predicated region
      $region9: #{decoder_prenet.1} parent=5 // pred_check
        _
      $region10: #{decoder_prenet.1} parent=5 // pred_check_branch
        %207 = sbr.rel (%p204) target = $region12
      $region11: #{decoder_prenet.1} parent=5 // pred_region
        %s208 = ssub.s32 %s16, 1
        // Predicated region
        $region13: #{decoder_prenet.1} parent=11 // pred_check
          %p209 = pneg %p63
        $region14: #{decoder_prenet.1} parent=11 // pred_check_branch
          %211 = sbr.rel (%p209) target = $region16
        $region15: #{decoder_prenet.1} parent=11 // pred_region
          _
        $region16: #{decoder_prenet.1} parent=11 // pred_fallthru
          _
        // Predicated region
        $region17: #{decoder_prenet.1} parent=11 // pred_check
          %p212 = pneg %p84
        $region18: #{decoder_prenet.1} parent=11 // pred_check_branch
          %214 = sbr.rel (%p212) target = $region20
        $region19: #{decoder_prenet.1} parent=11 // pred_region
          _
        $region20: #{decoder_prenet.1} parent=11 // pred_fallthru
          _
        // Predicated region
        $region21: #{decoder_prenet.1} parent=11 // pred_check
          %p215 = pneg %p105
        $region22: #{decoder_prenet.1} parent=11 // pred_check_branch
          %217 = sbr.rel (%p215) target = $region24
        $region23: #{decoder_prenet.1} parent=11 // pred_region
          _
        $region24: #{decoder_prenet.1} parent=11 // pred_fallthru
          _
        // Predicated region
        $region25: #{decoder_prenet.1} parent=11 // pred_check
          %p218 = pneg %p126
        $region26: #{decoder_prenet.1} parent=11 // pred_check_branch
          %220 = sbr.rel (%p218) target = $region28
        $region27: #{decoder_prenet.1} parent=11 // pred_region
          _
        $region28: #{decoder_prenet.1} parent=11 // pred_fallthru
          _
        // Predicated region
        $region29: #{decoder_prenet.1} parent=11 // pred_check
          %p221 = pneg %p147
        $region30: #{decoder_prenet.1} parent=11 // pred_check_branch
          %223 = sbr.rel (%p221) target = $region32
        $region31: #{decoder_prenet.1} parent=11 // pred_region
          _
        $region32: #{decoder_prenet.1} parent=11 // pred_fallthru
          _
        // Predicated region
        $region33: #{decoder_prenet.1} parent=11 // pred_check
          %p224 = pneg %p168
        $region34: #{decoder_prenet.1} parent=11 // pred_check_branch
          %226 = sbr.rel (%p224) target = $region36
        $region35: #{decoder_prenet.1} parent=11 // pred_region
          _
        $region36: #{decoder_prenet.1} parent=11 // pred_fallthru
          _
      $region12: #{decoder_prenet.1} parent=5 // pred_fallthru
        _
      %p227 = scmp.lt.s32.totalorder %s16, 2
      // Predicated region
      $region37: #{decoder_prenet.1} parent=5 // pred_check
        %p228 = pneg %p227
      $region38: #{decoder_prenet.1} parent=5 // pred_check_branch
        %230 = sbr.rel (%p228) target = $region40
      $region39: #{decoder_prenet.1} parent=5 // pred_region
        // Predicated region
        $region41: #{decoder_prenet.1} parent=39 // pred_check
          %p231 = pneg %p36
        $region42: #{decoder_prenet.1} parent=39 // pred_check_branch
          %233 = sbr.rel (%p231) target = $region44
        $region43: #{decoder_prenet.1} parent=39 // pred_region
          %p234 = scmp.lt.s32.totalorder %s16, 1
          %s235 = scalar_select %p234, %s16, 1
          %s236 = smul.addr %s235, 8
          %s237 = scalar_lea.vmem %s0, %s236
        $region44: #{decoder_prenet.1} parent=39 // pred_fallthru
          _
      $region40: #{decoder_prenet.1} parent=5 // pred_fallthru
        _
      %p238 = scmp.le.s32.totalorder 1, %s16
      %p239 = scmp.lt.s32.totalorder %s16, 3
      %p240 = pnand %p238, %p239
      %p241 = pneg %p240
      // Predicated region
      $region45: #{decoder_prenet.1} parent=5 // pred_check
        _
      $region46: #{decoder_prenet.1} parent=5 // pred_check_branch
        %243 = sbr.rel (%p240) target = $region48
      $region47: #{decoder_prenet.1} parent=5 // pred_region
        %s244 = ssub.s32 %s16, 1
        %p245 = scmp.lt.s32.totalorder %s21, 1
        %s246 = scalar_select %p245, %s21, 1
        %s247 = smul.addr %s246, 8
        %s248 = scalar_lea.vmem %s0, %s247
        %p249 = pneg %p42
        %p250 = pneg %p39
        %p251 = pneg %p63
        %p252 = pneg %p60
        %p253 = pneg %p84
        %p254 = pneg %p81
        %p255 = pneg %p105
        %p256 = pneg %p102
        %p257 = pneg %p126
        %p258 = pneg %p123
        %p259 = pneg %p147
        %p260 = pneg %p144
        %p261 = pneg %p168
        %p262 = pneg %p165
        %p263 = pneg %p194
        %p264 = pneg %p191
        %s265 = sand.u32 %s181, 1
        %s266 = scalar_lea.sflag [#allocation3], %s265
        %s267 = sand.u32 %s181, 1
        %s268 = smul.addr %s267, 16
        %s269 = scalar_lea.vmem [#allocation2], %s268
        %p270 = scmp.lt.s32.totalorder %s21, 1
        %s271 = scalar_select %p270, %s21, 1
        %s272 = smul.addr %s271, 8
        %s273 = scalar_lea.vmem %s0, %s272
        %v275 = vld [vmem:[%s273] sm:$0xff]
        %v276 = vpack.c.bf16 %v275, %v275
        %v277 = vld [vmem:[%s1] sm:$0xff]
        %v278 = vld [vmem:[%s1 + $0x8] sm:$0xff]
        %v279 = vld [vmem:[%s1 + $0x10] sm:$0xff]
        %v280 = vld [vmem:[%s1 + $0x18] sm:$0xff]
        %v281 = vld [vmem:[%s1 + $0x20] sm:$0xff]
        %v282 = vld [vmem:[%s1 + $0x28] sm:$0xff]
        %v283 = vld [vmem:[%s1 + $0x30] sm:$0xff]
        %v284 = vld [vmem:[%s1 + $0x38] sm:$0xff]
        %v285 = vld [vmem:[%s1 + $0x40] sm:$0xff]
        %v286 = vld [vmem:[%s1 + $0x48] sm:$0xff]
        %v287 = vld [vmem:[%s2] sm:$0x3]
        %v289 = vperm.slane %v287, 0
        %v290 = vperm.slane %v287, 1
        %v303 = vunpack.c.l.b16 %v277
        %v304 = vunpack.c.h.b16 %v277
        %v305 = vunpack.c.l.b16 %v278
        %v306 = vunpack.c.h.b16 %v278
        %v307 = vunpack.c.l.b16 %v279
        %v308 = vunpack.c.h.b16 %v279
        %v309 = vunpack.c.l.b16 %v280
        %v310 = vunpack.c.h.b16 %v280
        %v311 = vunpack.c.l.b16 %v281
        %v312 = vunpack.c.h.b16 %v281
        %v313 = vunpack.c.l.b16 %v282
        %v314 = vunpack.c.h.b16 %v282
        %v315 = vunpack.c.l.b16 %v283
        %v316 = vunpack.c.h.b16 %v283
        %v317 = vunpack.c.l.b16 %v284
        %v318 = vunpack.c.h.b16 %v284
        %v319 = vunpack.c.l.b16 %v285
        %v320 = vunpack.c.h.b16 %v285
        %v321 = vunpack.c.l.b16 %v286
        %v322 = vunpack.c.h.b16 %v286
        %v323 = vpack.c.b16 %v305, %v303
        %v324 = vpack.c.b16 %v306, %v304
        %v325 = vpack.c.b16 %v309, %v307
        %v326 = vpack.c.b16 %v310, %v308
        %v327 = vpack.c.b16 %v313, %v311
        %v328 = vpack.c.b16 %v314, %v312
        %v329 = vpack.c.b16 %v317, %v315
        %v330 = vpack.c.b16 %v318, %v316
        %v331 = vpack.c.b16 %v321, %v319
        %v332 = vpack.c.b16 %v322, %v320
        %vm343 = vcmask 654336
        %v345 = vsel %vm343, %v276, 0
        %347 = vmatpush.bf16.msra.mxu0 0
        %348 = vmatpush.bf16.msra.mxu0 0
        %349 = vmatpush.bf16.msra.mxu0 0
        %350 = vmatpush.bf16.msra.mxu0 %v331
        %351 = vmatpush.bf16.msra.mxu0 %v329
        %352 = vmatpush.bf16.msra.mxu0 %v327
        %353 = vmatpush.bf16.msra.mxu0 %v325
        %354 = vmatpush.bf16.msra.mxu0 %v323
        %355 = vmatmul.bf16.gmra.mxu0 %v345
        %v356 = vpop.f32.mrf.mxu0
        %v357 = vadd.f32 %v289, %v356
        %v358 = vpop.f32.mrf.mxu0
        %359 = vdwg.mxu0
        %360 = vmatpush.bf16.msra.mxu0 0
        %361 = vmatpush.bf16.msra.mxu0 0
        %362 = vmatpush.bf16.msra.mxu0 0
        %363 = vmatpush.bf16.msra.mxu0 %v332
        %364 = vmatpush.bf16.msra.mxu0 %v330
        %365 = vmatpush.bf16.msra.mxu0 %v328
        %366 = vmatpush.bf16.msra.mxu0 %v326
        %367 = vmatpush.bf16.msra.mxu0 %v324
        %368 = vmatmul.bf16.gmra.mxu0 %v345
        %v369 = vpop.f32.mrf.mxu0
        %v370 = vadd.f32 %v290, %v369
        %v371 = vpop.f32.mrf.mxu0
        %372 = vdwg.mxu0
        %v373 = vmax.f32 %v357, 0.0
        %v374 = vmax.f32 %v370, 0.0
        %v375 = vpack.c.bf16 %v373, %v373
        %v376 = vpack.c.bf16 %v374, %v374
        %v377 = vld [vmem:[%s3] sm:$0xff]
        %v378 = vld [vmem:[%s3 + $0x8] sm:$0xff]
        %v379 = vld [vmem:[%s3 + $0x10] sm:$0xff]
        %v380 = vld [vmem:[%s3 + $0x18] sm:$0xff]
        %v381 = vld [vmem:[%s3 + $0x20] sm:$0xff]
        %v382 = vld [vmem:[%s3 + $0x28] sm:$0xff]
        %v383 = vld [vmem:[%s3 + $0x30] sm:$0xff]
        %v384 = vld [vmem:[%s3 + $0x38] sm:$0xff]
        %v385 = vld [vmem:[%s3 + $0x40] sm:$0xff]
        %v386 = vld [vmem:[%s3 + $0x48] sm:$0xff]
        %v387 = vld [vmem:[%s3 + $0x50] sm:$0xff]
        %v388 = vld [vmem:[%s3 + $0x58] sm:$0xff]
        %v389 = vld [vmem:[%s3 + $0x60] sm:$0xff]
        %v390 = vld [vmem:[%s3 + $0x68] sm:$0xff]
        %v391 = vld [vmem:[%s3 + $0x70] sm:$0xff]
        %v392 = vld [vmem:[%s3 + $0x78] sm:$0xff]
        %v393 = vld [vmem:[%s3 + $0x80] sm:$0xff]
        %v394 = vld [vmem:[%s3 + $0x88] sm:$0xff]
        %v395 = vld [vmem:[%s3 + $0x90] sm:$0xff]
        %v396 = vld [vmem:[%s3 + $0x98] sm:$0xff]
        %v397 = vld [vmem:[%s3 + $0xa0] sm:$0xff]
        %v398 = vld [vmem:[%s3 + $0xa8] sm:$0xff]
        %v399 = vld [vmem:[%s3 + $0xb0] sm:$0xff]
        %v400 = vld [vmem:[%s3 + $0xb8] sm:$0xff]
        %v401 = vld [vmem:[%s3 + $0xc0] sm:$0xff]
        %v402 = vld [vmem:[%s3 + $0xc8] sm:$0xff]
        %v403 = vld [vmem:[%s3 + $0xd0] sm:$0xff]
        %v404 = vld [vmem:[%s3 + $0xd8] sm:$0xff]
        %v405 = vld [vmem:[%s3 + $0xe0] sm:$0xff]
        %v406 = vld [vmem:[%s3 + $0xe8] sm:$0xff]
        %v407 = vld [vmem:[%s3 + $0xf0] sm:$0xff]
        %v408 = vld [vmem:[%s3 + $0xf8] sm:$0xff]
        %v409 = vld [vmem:[%s4] sm:$0x3]
        %v411 = vperm.slane %v409, 0
        %v412 = vperm.slane %v409, 1
        %v447 = vunpack.c.l.b16 %v377
        %v448 = vunpack.c.h.b16 %v377
        %v449 = vunpack.c.l.b16 %v378
        %v450 = vunpack.c.h.b16 %v378
        %v451 = vunpack.c.l.b16 %v379
        %v452 = vunpack.c.h.b16 %v379
        %v453 = vunpack.c.l.b16 %v380
        %v454 = vunpack.c.h.b16 %v380
        %v455 = vunpack.c.l.b16 %v381
        %v456 = vunpack.c.h.b16 %v381
        %v457 = vunpack.c.l.b16 %v382
        %v458 = vunpack.c.h.b16 %v382
        %v459 = vunpack.c.l.b16 %v383
        %v460 = vunpack.c.h.b16 %v383
        %v461 = vunpack.c.l.b16 %v384
        %v462 = vunpack.c.h.b16 %v384
        %v463 = vunpack.c.l.b16 %v385
        %v464 = vunpack.c.h.b16 %v385
        %v465 = vunpack.c.l.b16 %v386
        %v466 = vunpack.c.h.b16 %v386
        %v467 = vunpack.c.l.b16 %v387
        %v468 = vunpack.c.h.b16 %v387
        %v469 = vunpack.c.l.b16 %v388
        %v470 = vunpack.c.h.b16 %v388
        %v471 = vunpack.c.l.b16 %v389
        %v472 = vunpack.c.h.b16 %v389
        %v473 = vunpack.c.l.b16 %v390
        %v474 = vunpack.c.h.b16 %v390
        %v475 = vunpack.c.l.b16 %v391
        %v476 = vunpack.c.h.b16 %v391
        %v477 = vunpack.c.l.b16 %v392
        %v478 = vunpack.c.h.b16 %v392
        %v479 = vunpack.c.l.b16 %v393
        %v480 = vunpack.c.h.b16 %v393
        %v481 = vunpack.c.l.b16 %v394
        %v482 = vunpack.c.h.b16 %v394
        %v483 = vunpack.c.l.b16 %v395
        %v484 = vunpack.c.h.b16 %v395
        %v485 = vunpack.c.l.b16 %v396
        %v486 = vunpack.c.h.b16 %v396
        %v487 = vunpack.c.l.b16 %v397
        %v488 = vunpack.c.h.b16 %v397
        %v489 = vunpack.c.l.b16 %v398
        %v490 = vunpack.c.h.b16 %v398
        %v491 = vunpack.c.l.b16 %v399
        %v492 = vunpack.c.h.b16 %v399
        %v493 = vunpack.c.l.b16 %v400
        %v494 = vunpack.c.h.b16 %v400
        %v495 = vunpack.c.l.b16 %v401
        %v496 = vunpack.c.h.b16 %v401
        %v497 = vunpack.c.l.b16 %v402
        %v498 = vunpack.c.h.b16 %v402
        %v499 = vunpack.c.l.b16 %v403
        %v500 = vunpack.c.h.b16 %v403
        %v501 = vunpack.c.l.b16 %v404
        %v502 = vunpack.c.h.b16 %v404
        %v503 = vunpack.c.l.b16 %v405
        %v504 = vunpack.c.h.b16 %v405
        %v505 = vunpack.c.l.b16 %v406
        %v506 = vunpack.c.h.b16 %v406
        %v507 = vunpack.c.l.b16 %v407
        %v508 = vunpack.c.h.b16 %v407
        %v509 = vunpack.c.l.b16 %v408
        %v510 = vunpack.c.h.b16 %v408
        %v511 = vpack.c.b16 %v449, %v447
        %v512 = vpack.c.b16 %v450, %v448
        %v513 = vpack.c.b16 %v453, %v451
        %v514 = vpack.c.b16 %v454, %v452
        %v515 = vpack.c.b16 %v457, %v455
        %v516 = vpack.c.b16 %v458, %v456
        %v517 = vpack.c.b16 %v461, %v459
        %v518 = vpack.c.b16 %v462, %v460
        %v519 = vpack.c.b16 %v465, %v463
        %v520 = vpack.c.b16 %v466, %v464
        %v521 = vpack.c.b16 %v469, %v467
        %v522 = vpack.c.b16 %v470, %v468
        %v523 = vpack.c.b16 %v473, %v471
        %v524 = vpack.c.b16 %v474, %v472
        %v525 = vpack.c.b16 %v477, %v475
        %v526 = vpack.c.b16 %v478, %v476
        %v527 = vpack.c.b16 %v481, %v479
        %v528 = vpack.c.b16 %v482, %v480
        %v529 = vpack.c.b16 %v485, %v483
        %v530 = vpack.c.b16 %v486, %v484
        %v531 = vpack.c.b16 %v489, %v487
        %v532 = vpack.c.b16 %v490, %v488
        %v533 = vpack.c.b16 %v493, %v491
        %v534 = vpack.c.b16 %v494, %v492
        %v535 = vpack.c.b16 %v497, %v495
        %v536 = vpack.c.b16 %v498, %v496
        %v537 = vpack.c.b16 %v501, %v499
        %v538 = vpack.c.b16 %v502, %v500
        %v539 = vpack.c.b16 %v505, %v503
        %v540 = vpack.c.b16 %v506, %v504
        %v541 = vpack.c.b16 %v509, %v507
        %v542 = vpack.c.b16 %v510, %v508
        %575 = vmatpush.bf16.msra.mxu0 %v525
        %576 = vmatpush.bf16.msra.mxu0 %v523
        %577 = vmatpush.bf16.msra.mxu0 %v521
        %578 = vmatpush.bf16.msra.mxu0 %v519
        %579 = vmatpush.bf16.msra.mxu0 %v517
        %580 = vmatpush.bf16.msra.mxu0 %v515
        %581 = vmatpush.bf16.msra.mxu0 %v513
        %582 = vmatpush.bf16.msra.mxu0 %v511
        %583 = vmatmul.bf16.gmra.mxu0 %v375
        %v584 = vpop.f32.mrf.mxu0
        %v585 = vadd.f32 %v411, %v584
        %v586 = vpop.f32.mrf.mxu0
        %587 = vdwg.mxu0
        %588 = vmatpush.bf16.msra.mxu0 %v541
        %589 = vmatpush.bf16.msra.mxu0 %v539
        %590 = vmatpush.bf16.msra.mxu0 %v537
        %591 = vmatpush.bf16.msra.mxu0 %v535
        %592 = vmatpush.bf16.msra.mxu0 %v533
        %593 = vmatpush.bf16.msra.mxu0 %v531
        %594 = vmatpush.bf16.msra.mxu0 %v529
        %595 = vmatpush.bf16.msra.mxu0 %v527
        %596 = vmatmul.bf16.gmra.mxu0 %v376
        %v597 = vpop.f32.mrf.mxu0
        %v598 = vadd.f32 %v585, %v597
        %v599 = vpop.f32.mrf.mxu0
        %600 = vdwg.mxu0
        %601 = vmatpush.bf16.msra.mxu0 %v526
        %602 = vmatpush.bf16.msra.mxu0 %v524
        %603 = vmatpush.bf16.msra.mxu0 %v522
        %604 = vmatpush.bf16.msra.mxu0 %v520
        %605 = vmatpush.bf16.msra.mxu0 %v518
        %606 = vmatpush.bf16.msra.mxu0 %v516
        %607 = vmatpush.bf16.msra.mxu0 %v514
        %608 = vmatpush.bf16.msra.mxu0 %v512
        %609 = vmatmul.bf16.gmra.mxu0 %v375
        %v610 = vpop.f32.mrf.mxu0
        %v611 = vadd.f32 %v412, %v610
        %v612 = vpop.f32.mrf.mxu0
        %613 = vdwg.mxu0
        %614 = vmatpush.bf16.msra.mxu0 %v542
        %615 = vmatpush.bf16.msra.mxu0 %v540
        %616 = vmatpush.bf16.msra.mxu0 %v538
        %617 = vmatpush.bf16.msra.mxu0 %v536
        %618 = vmatpush.bf16.msra.mxu0 %v534
        %619 = vmatpush.bf16.msra.mxu0 %v532
        %620 = vmatpush.bf16.msra.mxu0 %v530
        %621 = vmatpush.bf16.msra.mxu0 %v528
        %622 = vmatmul.bf16.gmra.mxu0 %v376
        %v623 = vpop.f32.mrf.mxu0
        %v624 = vadd.f32 %v611, %v623
        %v625 = vpop.f32.mrf.mxu0
        %626 = vdwg.mxu0
        %v627 = vmax.f32 %v598, 0.0
        %v628 = vmax.f32 %v624, 0.0
        %v629 = vpack.c.bf16 %v627, %v627
        %v630 = vpack.c.bf16 %v628, %v628
        %v631 = vld [vmem:[%s5] sm:$0xff]
        %v632 = vld [vmem:[%s5 + $0x8] sm:$0xff]
        %v633 = vld [vmem:[%s5 + $0x10] sm:$0xff]
        %v634 = vld [vmem:[%s5 + $0x18] sm:$0xff]
        %v635 = vld [vmem:[%s5 + $0x20] sm:$0xff]
        %v636 = vld [vmem:[%s5 + $0x28] sm:$0xff]
        %v637 = vld [vmem:[%s5 + $0x30] sm:$0xff]
        %v638 = vld [vmem:[%s5 + $0x38] sm:$0xff]
        %v639 = vld [vmem:[%s5 + $0x40] sm:$0xff]
        %v640 = vld [vmem:[%s5 + $0x48] sm:$0xff]
        %v641 = vld [vmem:[%s5 + $0x50] sm:$0xff]
        %v642 = vld [vmem:[%s5 + $0x58] sm:$0xff]
        %v643 = vld [vmem:[%s5 + $0x60] sm:$0xff]
        %v644 = vld [vmem:[%s5 + $0x68] sm:$0xff]
        %v645 = vld [vmem:[%s5 + $0x70] sm:$0xff]
        %v646 = vld [vmem:[%s5 + $0x78] sm:$0xff]
        %v647 = vld [vmem:[%s5 + $0x80] sm:$0xff]
        %v648 = vld [vmem:[%s5 + $0x88] sm:$0xff]
        %v649 = vld [vmem:[%s5 + $0x90] sm:$0xff]
        %v650 = vld [vmem:[%s5 + $0x98] sm:$0xff]
        %v651 = vld [vmem:[%s5 + $0xa0] sm:$0xff]
        %v652 = vld [vmem:[%s5 + $0xa8] sm:$0xff]
        %v653 = vld [vmem:[%s5 + $0xb0] sm:$0xff]
        %v654 = vld [vmem:[%s5 + $0xb8] sm:$0xff]
        %v655 = vld [vmem:[%s5 + $0xc0] sm:$0xff]
        %v656 = vld [vmem:[%s5 + $0xc8] sm:$0xff]
        %v657 = vld [vmem:[%s5 + $0xd0] sm:$0xff]
        %v658 = vld [vmem:[%s5 + $0xd8] sm:$0xff]
        %v659 = vld [vmem:[%s5 + $0xe0] sm:$0xff]
        %v660 = vld [vmem:[%s5 + $0xe8] sm:$0xff]
        %v661 = vld [vmem:[%s5 + $0xf0] sm:$0xff]
        %v662 = vld [vmem:[%s5 + $0xf8] sm:$0xff]
        %v663 = vld [vmem:[%s6] sm:$0x3]
        %v665 = vperm.slane %v663, 0
        %v666 = vperm.slane %v663, 1
        %v701 = vunpack.c.l.b16 %v631
        %v702 = vunpack.c.h.b16 %v631
        %v703 = vunpack.c.l.b16 %v632
        %v704 = vunpack.c.h.b16 %v632
        %v705 = vunpack.c.l.b16 %v633
        %v706 = vunpack.c.h.b16 %v633
        %v707 = vunpack.c.l.b16 %v634
        %v708 = vunpack.c.h.b16 %v634
        %v709 = vunpack.c.l.b16 %v635
        %v710 = vunpack.c.h.b16 %v635
        %v711 = vunpack.c.l.b16 %v636
        %v712 = vunpack.c.h.b16 %v636
        %v713 = vunpack.c.l.b16 %v637
        %v714 = vunpack.c.h.b16 %v637
        %v715 = vunpack.c.l.b16 %v638
        %v716 = vunpack.c.h.b16 %v638
        %v717 = vunpack.c.l.b16 %v639
        %v718 = vunpack.c.h.b16 %v639
        %v719 = vunpack.c.l.b16 %v640
        %v720 = vunpack.c.h.b16 %v640
        %v721 = vunpack.c.l.b16 %v641
        %v722 = vunpack.c.h.b16 %v641
        %v723 = vunpack.c.l.b16 %v642
        %v724 = vunpack.c.h.b16 %v642
        %v725 = vunpack.c.l.b16 %v643
        %v726 = vunpack.c.h.b16 %v643
        %v727 = vunpack.c.l.b16 %v644
        %v728 = vunpack.c.h.b16 %v644
        %v729 = vunpack.c.l.b16 %v645
        %v730 = vunpack.c.h.b16 %v645
        %v731 = vunpack.c.l.b16 %v646
        %v732 = vunpack.c.h.b16 %v646
        %v733 = vunpack.c.l.b16 %v647
        %v734 = vunpack.c.h.b16 %v647
        %v735 = vunpack.c.l.b16 %v648
        %v736 = vunpack.c.h.b16 %v648
        %v737 = vunpack.c.l.b16 %v649
        %v738 = vunpack.c.h.b16 %v649
        %v739 = vunpack.c.l.b16 %v650
        %v740 = vunpack.c.h.b16 %v650
        %v741 = vunpack.c.l.b16 %v651
        %v742 = vunpack.c.h.b16 %v651
        %v743 = vunpack.c.l.b16 %v652
        %v744 = vunpack.c.h.b16 %v652
        %v745 = vunpack.c.l.b16 %v653
        %v746 = vunpack.c.h.b16 %v653
        %v747 = vunpack.c.l.b16 %v654
        %v748 = vunpack.c.h.b16 %v654
        %v749 = vunpack.c.l.b16 %v655
        %v750 = vunpack.c.h.b16 %v655
        %v751 = vunpack.c.l.b16 %v656
        %v752 = vunpack.c.h.b16 %v656
        %v753 = vunpack.c.l.b16 %v657
        %v754 = vunpack.c.h.b16 %v657
        %v755 = vunpack.c.l.b16 %v658
        %v756 = vunpack.c.h.b16 %v658
        %v757 = vunpack.c.l.b16 %v659
        %v758 = vunpack.c.h.b16 %v659
        %v759 = vunpack.c.l.b16 %v660
        %v760 = vunpack.c.h.b16 %v660
        %v761 = vunpack.c.l.b16 %v661
        %v762 = vunpack.c.h.b16 %v661
        %v763 = vunpack.c.l.b16 %v662
        %v764 = vunpack.c.h.b16 %v662
        %v765 = vpack.c.b16 %v703, %v701
        %v766 = vpack.c.b16 %v704, %v702
        %v767 = vpack.c.b16 %v707, %v705
        %v768 = vpack.c.b16 %v708, %v706
        %v769 = vpack.c.b16 %v711, %v709
        %v770 = vpack.c.b16 %v712, %v710
        %v771 = vpack.c.b16 %v715, %v713
        %v772 = vpack.c.b16 %v716, %v714
        %v773 = vpack.c.b16 %v719, %v717
        %v774 = vpack.c.b16 %v720, %v718
        %v775 = vpack.c.b16 %v723, %v721
        %v776 = vpack.c.b16 %v724, %v722
        %v777 = vpack.c.b16 %v727, %v725
        %v778 = vpack.c.b16 %v728, %v726
        %v779 = vpack.c.b16 %v731, %v729
        %v780 = vpack.c.b16 %v732, %v730
        %v781 = vpack.c.b16 %v735, %v733
        %v782 = vpack.c.b16 %v736, %v734
        %v783 = vpack.c.b16 %v739, %v737
        %v784 = vpack.c.b16 %v740, %v738
        %v785 = vpack.c.b16 %v743, %v741
        %v786 = vpack.c.b16 %v744, %v742
        %v787 = vpack.c.b16 %v747, %v745
        %v788 = vpack.c.b16 %v748, %v746
        %v789 = vpack.c.b16 %v751, %v749
        %v790 = vpack.c.b16 %v752, %v750
        %v791 = vpack.c.b16 %v755, %v753
        %v792 = vpack.c.b16 %v756, %v754
        %v793 = vpack.c.b16 %v759, %v757
        %v794 = vpack.c.b16 %v760, %v758
        %v795 = vpack.c.b16 %v763, %v761
        %v796 = vpack.c.b16 %v764, %v762
        %829 = vmatpush.bf16.msra.mxu0 %v779
        %830 = vmatpush.bf16.msra.mxu0 %v777
        %831 = vmatpush.bf16.msra.mxu0 %v775
        %832 = vmatpush.bf16.msra.mxu0 %v773
        %833 = vmatpush.bf16.msra.mxu0 %v771
        %834 = vmatpush.bf16.msra.mxu0 %v769
        %835 = vmatpush.bf16.msra.mxu0 %v767
        %836 = vmatpush.bf16.msra.mxu0 %v765
        %837 = vmatmul.bf16.gmra.mxu0 %v629
        %v838 = vpop.f32.mrf.mxu0
        %v839 = vadd.f32 %v665, %v838
        %v840 = vpop.f32.mrf.mxu0
        %841 = vdwg.mxu0
        %842 = vmatpush.bf16.msra.mxu0 %v795
        %843 = vmatpush.bf16.msra.mxu0 %v793
        %844 = vmatpush.bf16.msra.mxu0 %v791
        %845 = vmatpush.bf16.msra.mxu0 %v789
        %846 = vmatpush.bf16.msra.mxu0 %v787
        %847 = vmatpush.bf16.msra.mxu0 %v785
        %848 = vmatpush.bf16.msra.mxu0 %v783
        %849 = vmatpush.bf16.msra.mxu0 %v781
        %850 = vmatmul.bf16.gmra.mxu0 %v630
        %v851 = vpop.f32.mrf.mxu0
        %v852 = vadd.f32 %v839, %v851
        %v853 = vpop.f32.mrf.mxu0
        %854 = vdwg.mxu0
        %855 = vmatpush.bf16.msra.mxu0 %v780
        %856 = vmatpush.bf16.msra.mxu0 %v778
        %857 = vmatpush.bf16.msra.mxu0 %v776
        %858 = vmatpush.bf16.msra.mxu0 %v774
        %859 = vmatpush.bf16.msra.mxu0 %v772
        %860 = vmatpush.bf16.msra.mxu0 %v770
        %861 = vmatpush.bf16.msra.mxu0 %v768
        %862 = vmatpush.bf16.msra.mxu0 %v766
        %863 = vmatmul.bf16.gmra.mxu0 %v629
        %v864 = vpop.f32.mrf.mxu0
        %v865 = vadd.f32 %v666, %v864
        %v866 = vpop.f32.mrf.mxu0
        %867 = vdwg.mxu0
        %868 = vmatpush.bf16.msra.mxu0 %v796
        %869 = vmatpush.bf16.msra.mxu0 %v794
        %870 = vmatpush.bf16.msra.mxu0 %v792
        %871 = vmatpush.bf16.msra.mxu0 %v790
        %872 = vmatpush.bf16.msra.mxu0 %v788
        %873 = vmatpush.bf16.msra.mxu0 %v786
        %874 = vmatpush.bf16.msra.mxu0 %v784
        %875 = vmatpush.bf16.msra.mxu0 %v782
        %876 = vmatmul.bf16.gmra.mxu0 %v630
        %v877 = vpop.f32.mrf.mxu0
        %v878 = vadd.f32 %v865, %v877
        %v879 = vpop.f32.mrf.mxu0
        %880 = vdwg.mxu0
        %881 = vst [vmem:[%s269] sm:$0xff] %v852
        %882 = vst [vmem:[%s269 + $0x8] sm:$0xff] %v878
        %s883 = sand.u32 %s181, 1
        %s884 = scalar_lea.sflag [#allocation3], %s883
        %s885 = sand.u32 %s181, 1
        %s886 = smul.addr %s885, 16
        %s887 = scalar_lea.vmem [#allocation2], %s886
        // Predicated region
        $region49: #{decoder_prenet.1} parent=47 // pred_check
          %p888 = pneg %p191
        $region50: #{decoder_prenet.1} parent=47 // pred_check_branch
          %890 = sbr.rel (%p888) target = $region52
        $region51: #{decoder_prenet.1} parent=47 // pred_region
          %892 = vsyncadd %s884, 0
          %s893 = smul.addr %s21, 2
          %s894 = smul.addr %s893, 8
          %s895 = scalar_lea.hbm %s7, %s894
          %s897 = sshll.u32 %s887, 4
          %s898 = int_to_ptr.vmem [resolvable:$true] %s897
          %s899 = sshll.u32 %s895, 4
          %s900 = int_to_ptr.hbm [resolvable:$true] %s899
          %902 = dma.vmem_to_hbm [thread:$0]  %s898, 256, %s900, %s884
        $region52: #{decoder_prenet.1} parent=47 // pred_fallthru
          _
      $region48: #{decoder_prenet.1} parent=5 // pred_fallthru
        _
      %p903 = scmp.le.s32.totalorder 2, %s16
      // Predicated region
      $region53: #{decoder_prenet.1} parent=5 // pred_check
        %p904 = pneg %p903
      $region54: #{decoder_prenet.1} parent=5 // pred_check_branch
        %906 = sbr.rel (%p904) target = $region56
      $region55: #{decoder_prenet.1} parent=5 // pred_region
        %s907 = ssub.s32 %s16, 2
        // Predicated region
        $region57: #{decoder_prenet.1} parent=55 // pred_check
          %p908 = pneg %p197
        $region58: #{decoder_prenet.1} parent=55 // pred_check_branch
          %910 = sbr.rel (%p908) target = $region60
        $region59: #{decoder_prenet.1} parent=55 // pred_region
          %s911 = sand.u32 %s182, 1
          %s912 = scalar_lea.sflag [#allocation3], %s911
          %s913 = sand.u32 %s182, 1
          %s914 = smul.addr %s913, 16
          %s915 = scalar_lea.vmem [#allocation2], %s914
          %917 = dma.done %s912, 256
        $region60: #{decoder_prenet.1} parent=55 // pred_fallthru
          _
      $region56: #{decoder_prenet.1} parent=5 // pred_fallthru
        _
    $region6: #{decoder_prenet.1} parent=1 // loop_footer
      %s20 = sadd.s32 1, %s16
    $region7: #{decoder_prenet.1} parent=1 // loop_footer_branch
      %15 = sbr.rel target = $region3
    $region8: #{decoder_prenet.1} parent=1 // loop_exit
      _
    %918 = vsyncpa [#allocation3], 1
    %s919 = scalar_lea.sflag [#allocation3], 1
    %920 = vsyncpa %s919, 1

</llo_original>
